<compile_context>
chip_gen: v7x
topology: tpu7x:2x2x1
jax: 0.10.0
libtpu: 0.0.40
codegen_flags: <defaults>
</compile_context>

<pallas_src>
import functools

import jax
import jax.numpy as jnp
from jax import lax
from jax.experimental import pallas as pl
from jax.experimental.pallas import tpu as pltpu

_VMEM_LIMIT = 32 * 1024 * 1024  # explicit scoped-VMEM budget (above v5e's 16 MiB default)


def _round_up(x, m):
    return ((x + m - 1) // m) * m


def _pick_tile(dim, target, align):
    """Largest tile <= target: the full dim, or an `align`-multiple dividing dim."""
    if dim <= target:
        return dim
    t = (target // align) * align
    while t >= align:
        if dim % t == 0:
            return t
        t -= align
    return dim


# ---------------------------------------------------------------------------
# Linear kernel with fused LayerNorm prologue:  y = act(LN(x) @ W + b)
# Full-K blocks (K = C fits VMEM easily), so no K grid axis and LN never hits HBM.
# ---------------------------------------------------------------------------
def _ln_linear_kernel(x_ref, g_ref, bln_ref, w_ref, b_ref, o_ref, *, activation):
    x = x_ref[...].astype(jnp.float32)
    mu = jnp.mean(x, axis=-1, keepdims=True)
    xc = x - mu
    var = jnp.mean(xc * xc, axis=-1, keepdims=True)
    xn = xc * lax.rsqrt(var + 1e-5)
    xn = xn * g_ref[...].astype(jnp.float32) + bln_ref[...].astype(jnp.float32)
    y = jnp.dot(xn.astype(jnp.bfloat16), w_ref[...],
                preferred_element_type=jnp.float32)
    y = y + b_ref[...].astype(jnp.float32)
    if activation == "gelu":
        # TODO(synk): PyTorch nn.GELU() is the exact erf form; the tanh approximation
        # (max abs diff ~3e-4) is used for guaranteed Mosaic lowering.
        y = jax.nn.gelu(y, approximate=True)
    o_ref[...] = y.astype(o_ref.dtype)


# ---------------------------------------------------------------------------
# K-tiled linear kernel: y = act(x @ W + b) [+ residual]
# bf16 operands straight from HBM (no per-tile casts), f32 VMEM accumulator.
# ---------------------------------------------------------------------------
def _linear_kernel(*refs, activation, has_residual):
    if has_residual:
        x_ref, w_ref, b_ref, res_ref, o_ref, acc_ref = refs
    else:
        x_ref, w_ref, b_ref, o_ref, acc_ref = refs
        res_ref = None
    k = pl.program_id(2)

    @pl.when(k == 0)
    def _init():
        acc_ref[...] = jnp.zeros_like(acc_ref)

    acc_ref[...] += jnp.dot(x_ref[...], w_ref[...],
                            preferred_element_type=jnp.float32)

    @pl.when(k == pl.num_programs(2) - 1)
    def _finalize():
        y = acc_ref[...] + b_ref[...].astype(jnp.float32)
        if activation == "gelu":
            # TODO(synk): tanh-approx GELU (see note above).
            y = jax.nn.gelu(y, approximate=True)
        if has_residual:
            y = y + res_ref[...].astype(jnp.float32)
        o_ref[...] = y.astype(o_ref.dtype)


def linear(x2d, w, b, *, residual=None, activation=None, ln=None,
           out_dtype=None, tm=256, tn=512, tk=512):
    """y = act(LN?(x2d) @ w + b) [+ residual].  x2d:(M,K) bf16, w:(K,N) bf16, b:(N,) f32."""
    M, K = x2d.shape
    Kw, N = w.shape
    assert K == Kw
    out_dtype = x2d.dtype if out_dtype is None else out_dtype

    # --- M padding: keep the row tile in the efficient range even when B*N is
    #     not a multiple of anything nice (ViT: N=197).  Padded rows are sliced off.
    tm = min(tm, _round_up(M, 8))
    Mp = _round_up(M, tm)
    if Mp != M:
        x2d = jnp.pad(x2d, ((0, Mp - M), (0, 0)))
        if residual is not None:
            residual = jnp.pad(residual, ((0, Mp - M), (0, 0)))

    tn = _pick_tile(N, tn, 128)
    bias2d = b.reshape(1, N)

    if ln is not None:
        gamma, beta = ln
        out = pl.pallas_call(
            functools.partial(_ln_linear_kernel, activation=activation),
            out_shape=jax.ShapeDtypeStruct((Mp, N), out_dtype),
            grid_spec=pltpu.PrefetchScalarGridSpec(
                num_scalar_prefetch=0,
                grid=(Mp // tm, N // tn),
                in_specs=[
                    pl.BlockSpec((tm, K), lambda i, j: (i, 0)),
                    pl.BlockSpec((1, K), lambda i, j: (0, 0)),
                    pl.BlockSpec((1, K), lambda i, j: (0, 0)),
                    pl.BlockSpec((K, tn), lambda i, j: (0, j)),
                    pl.BlockSpec((1, tn), lambda i, j: (0, j)),
                ],
                out_specs=pl.BlockSpec((tm, tn), lambda i, j: (i, j)),
            ),
            compiler_params=pltpu.CompilerParams(
                dimension_semantics=("parallel", "parallel"),
                vmem_limit_bytes=_VMEM_LIMIT),
        )(x2d, gamma.reshape(1, K), beta.reshape(1, K), w, bias2d)
    else:
        tk = _pick_tile(K, tk, 128)
        has_residual = residual is not None
        in_specs = [
            pl.BlockSpec((tm, tk), lambda i, j, k: (i, k)),
            pl.BlockSpec((tk, tn), lambda i, j, k: (k, j)),
            pl.BlockSpec((1, tn), lambda i, j, k: (0, j)),
        ]
        args = [x2d, w, bias2d]
        if has_residual:
            in_specs.append(pl.BlockSpec((tm, tn), lambda i, j, k: (i, j)))
            args.append(residual)
        out = pl.pallas_call(
            functools.partial(_linear_kernel, activation=activation,
                              has_residual=has_residual),
            out_shape=jax.ShapeDtypeStruct((Mp, N), out_dtype),
            grid_spec=pltpu.PrefetchScalarGridSpec(
                num_scalar_prefetch=0,
                grid=(Mp // tm, N // tn, K // tk),
                in_specs=in_specs,
                out_specs=pl.BlockSpec((tm, tn), lambda i, j, k: (i, j)),
                scratch_shapes=[pltpu.VMEM((tm, tn), jnp.float32)],
            ),
            compiler_params=pltpu.CompilerParams(
                dimension_semantics=("parallel", "parallel", "arbitrary"),
                vmem_limit_bytes=_VMEM_LIMIT),
        )(*args)

    return out[:M] if Mp != M else out


# ---------------------------------------------------------------------------
# Attention core: grid = (batch, head-group).  Each step reads a lane-aligned
# (N, 3, GD) slice of the qkv slab, does per-head f32 softmax, and stores each
# head's (N, D) output directly into the lane-dense output block.
# The softmax scale is already folded into the q projection weights.
# ---------------------------------------------------------------------------
def _attention_kernel(qkv_ref, o_ref, *attn_refs, heads_per_group, head_dim):
    D = head_dim
    for h in range(heads_per_group):                         # static -> unrolled
        q_h = qkv_ref[0, :, 0, h * D:(h + 1) * D]            # (N, D) bf16, pre-scaled
        k_h = qkv_ref[0, :, 1, h * D:(h + 1) * D]
        v_h = qkv_ref[0, :, 2, h * D:(h + 1) * D]

        # q @ k^T without materializing a transpose (contract dim 1 of both).
        s = lax.dot_general(q_h, k_h, (((1,), (1,)), ((), ())),
                            preferred_element_type=jnp.float32)          # (N, N)
        m = jnp.max(s, axis=-1, keepdims=True)
        p = jnp.exp(s - m)
        attn = p * pl.reciprocal(jnp.sum(p, axis=-1, keepdims=True), approx=True)

        # Per-head store: no concat, live ranges freed every iteration.
        o_ref[0, :, h * D:(h + 1) * D] = jnp.dot(
            attn.astype(jnp.bfloat16), v_h,
            preferred_element_type=jnp.float32).astype(o_ref.dtype)

        if attn_refs:
            attn_refs[0][0, h, :, :] = attn.astype(attn_refs[0].dtype)


def attention_core(qkv4, heads, *, return_attn=False):
    """qkv4: (B, N, 3, C) bf16 with the 1/sqrt(D) scale pre-folded into q."""
    B, N, _, C = qkv4.shape
    D = C // heads

    # Head-group width: whole heads, lane-aligned (multiple of 128 lanes) when
    # possible (ViT D=64 -> 2/4 heads per group), else all heads (GD == C).
    hpg = heads
    if C % 128 == 0:
        for gd in (256, 128):
            if gd % D == 0 and C % gd == 0:
                hpg = gd // D
                break
    GD = hpg * D
    G = heads // hpg

    kern = functools.partial(_attention_kernel, heads_per_group=hpg, head_dim=D)
    in_specs = [pl.BlockSpec((1, N, 3, GD), lambda b, g: (b, 0, 0, g))]
    o_spec = pl.BlockSpec((1, N, GD), lambda b, g: (b, 0, g))
    if return_attn:
        out_shape = (jax.ShapeDtypeStruct((B, N, C), qkv4.dtype),
                     jax.ShapeDtypeStruct((B, heads, N, N), jnp.float32))
        out_specs = (o_spec, pl.BlockSpec((1, hpg, N, N), lambda b, g: (b, g, 0, 0)))
    else:
        out_shape = jax.ShapeDtypeStruct((B, N, C), qkv4.dtype)
        out_specs = o_spec

    return pl.pallas_call(
        kern,
        out_shape=out_shape,
        grid_spec=pltpu.PrefetchScalarGridSpec(
            num_scalar_prefetch=0,
            grid=(B, G),
            in_specs=in_specs,
            out_specs=out_specs,
        ),
        compiler_params=pltpu.CompilerParams(
            dimension_semantics=("parallel", "parallel"),
            vmem_limit_bytes=_VMEM_LIMIT),
    )(qkv4)


# ---------------------------------------------------------------------------
# Parameter prep (one-time): bf16 weights, scale folded into q projection.
# ---------------------------------------------------------------------------
def prepare_params(params, dim, heads):
    D = dim // heads
    scale = float(D) ** -0.5
    col_scale = jnp.concatenate(
        [jnp.full((dim,), scale, jnp.float32), jnp.ones((2 * dim,), jnp.float32)])
    return {
        "ln1_g": params["ln1_g"].astype(jnp.float32),
        "ln1_b": params["ln1_b"].astype(jnp.float32),
        "ln2_g": params["ln2_g"].astype(jnp.float32),
        "ln2_b": params["ln2_b"].astype(jnp.float32),
        "qkv_w": (params["qkv_w"] * col_scale[None, :]).astype(jnp.bfloat16),
        "qkv_b": (params["qkv_b"] * col_scale).astype(jnp.float32),
        "proj_w": params["proj_w"].astype(jnp.bfloat16),
        "proj_b": params["proj_b"].astype(jnp.float32),
        "fc1_w": params["fc1_w"].astype(jnp.bfloat16),
        "fc1_b": params["fc1_b"].astype(jnp.float32),
        "fc2_w": params["fc2_w"].astype(jnp.bfloat16),
        "fc2_b": params["fc2_b"].astype(jnp.float32),
    }


# ---------------------------------------------------------------------------
# Block forward (eval mode: dropout / DropPath are identity; `mask` unused).
# ---------------------------------------------------------------------------
def block_forward(x, prep, heads, *, return_attention=False):
    B, N, C = x.shape
    x2d = x.reshape(B * N, C).astype(jnp.bfloat16)           # bf16 residual stream

    # attention branch: LN1 fused into the qkv projection
    qkv = linear(x2d, prep["qkv_w"], prep["qkv_b"],
                 ln=(prep["ln1_g"], prep["ln1_b"]))           # (B*N, 3C) bf16
    qkv4 = qkv.reshape(B, N, 3, C)                            # free (contiguous) reshape

    if return_attention:
        _, attn = attention_core(qkv4, heads, return_attn=True)
        return attn

    att = attention_core(qkv4, heads)                         # (B, N, C) bf16
    y1 = linear(att.reshape(B * N, C), prep["proj_w"], prep["proj_b"],
                residual=x2d)                                  # x + attn branch

    # MLP branch: LN2 fused into fc1, GELU fused, residual fused into fc2
    h = linear(y1, prep["fc1_w"], prep["fc1_b"],
               ln=(prep["ln2_g"], prep["ln2_b"]), activation="gelu")
    out = linear(h, prep["fc2_w"], prep["fc2_b"], residual=y1, out_dtype=x.dtype)
    return out.reshape(B, N, C)


def init_params(key, dim, mlp_dim):
    """Deterministic synthetic params matching nn.Linear / nn.LayerNorm shapes (f32)."""
    ks = jax.random.split(key, 8)

    def lin(kw, kb, fan_in, fan_out):
        s = 1.0 / jnp.sqrt(fan_in)
        return (jax.random.uniform(kw, (fan_in, fan_out), jnp.float32, -s, s),
                jax.random.uniform(kb, (fan_out,), jnp.float32, -s, s))

    qkv_w, qkv_b = lin(ks[0], ks[1], dim, 3 * dim)
    proj_w, proj_b = lin(ks[2], ks[3], dim, dim)
    fc1_w, fc1_b = lin(ks[4], ks[5], dim, mlp_dim)
    fc2_w, fc2_b = lin(ks[6], ks[7], mlp_dim, dim)
    return {
        "ln1_g": jnp.ones((dim,), jnp.float32), "ln1_b": jnp.zeros((dim,), jnp.float32),
        "ln2_g": jnp.ones((dim,), jnp.float32), "ln2_b": jnp.zeros((dim,), jnp.float32),
        "qkv_w": qkv_w, "qkv_b": qkv_b,
        "proj_w": proj_w, "proj_b": proj_b,
        "fc1_w": fc1_w, "fc1_b": fc1_b,
        "fc2_w": fc2_w, "fc2_b": fc2_b,
    }


# ---------------------------------------------------------------------------
# Pure-JAX f32 reference (matches the PyTorch Block forward)
# ---------------------------------------------------------------------------
def block_ref(x, params, heads, *, return_attention=False):
    def ln(z, g, b):
        mu = z.mean(-1, keepdims=True)
        var = ((z - mu) ** 2).mean(-1, keepdims=True)
        return (z - mu) / jnp.sqrt(var + 1e-5) * g + b

    B, N, C = x.shape
    D = C // heads
    scale = D ** -0.5
    xn = ln(x, params["ln1_g"], params["ln1_b"])
    qkv = xn @ params["qkv_w"] + params["qkv_b"]
    qkv = qkv.reshape(B, N, 3, heads, D).transpose(2, 0, 3, 1, 4)
    q, k, v = qkv[0], qkv[1], qkv[2]
    attn = jax.nn.softmax(jnp.einsum("bhnd,bhmd->bhnm", q, k) * scale, axis=-1)
    if return_attention:
        return attn
    y = jnp.einsum("bhnm,bhmd->bhnd", attn, v).transpose(0, 2, 1, 3).reshape(B, N, C)
    y = y @ params["proj_w"] + params["proj_b"]
    x = x + y
    xn2 = ln(x, params["ln2_g"], params["ln2_b"])
    h = xn2 @ params["fc1_w"] + params["fc1_b"]
    h = jax.nn.gelu(h, approximate=False)   # nn.GELU() = exact erf form
    h = h @ params["fc2_w"] + params["fc2_b"]
    return x + h


if __name__ == "__main__":
    B, N, C, H, MLP = 2, 8, 32, 4, 64   # batch, seq, dim, heads (head_dim=8), mlp_dim

    key = jax.random.PRNGKey(0)
    kx, kp = jax.random.split(key)
    x = jax.random.normal(kx, (B, N, C), jnp.float32)
    params = init_params(kp, C, MLP)
    prep = prepare_params(params, C, H)      # one-time bf16 cast + scale folding

    out = jax.block_until_ready(block_forward(x, prep, H))
    attn = jax.block_until_ready(block_forward(x, prep, H, return_attention=True))

    out_r = block_ref(x, params, H)
    attn_r = block_ref(x, params, H, return_attention=True)

    assert out.shape == (B, N, C) and attn.shape == (B, H, N, N)
    # bf16 weights/activations + approx reciprocal => ~1e-3..1e-2 level deviations vs f32 ref.
    assert jnp.allclose(out, out_r, atol=5e-2, rtol=5e-2), \
        f"out max abs diff {jnp.max(jnp.abs(out - out_r))}"
    assert jnp.allclose(attn, attn_r, atol=3e-2, rtol=3e-2), \
        f"attn max abs diff {jnp.max(jnp.abs(attn - attn_r))}"

    print("KERNEL_OK")
</pallas_src>

<mosaic_0001>
module attributes {stable_mosaic.version = 11 : i64} {
  func.func @_ln_linear_kernel(%arg0: i32, %arg1: i32, %arg2: memref<16x32xbf16, #tpu.memory_space<vmem>>, %arg3: memref<1x32xf32, #tpu.memory_space<vmem>>, %arg4: memref<1x32xf32, #tpu.memory_space<vmem>>, %arg5: memref<32x96xbf16, #tpu.memory_space<vmem>>, %arg6: memref<1x96xf32, #tpu.memory_space<vmem>>, %arg7: memref<16x96xbf16, #tpu.memory_space<vmem>>) attributes {dimension_semantics = [#tpu.dimension_semantics<parallel>, #tpu.dimension_semantics<parallel>], iteration_bounds = array<i64: 1, 1>, scalar_prefetch = 0 : i64, scratch_operands = 0 : i64, tpu.core_type = #tpu.core_type<tc>, window_params = [{transform_indices = @transform_0, window_bounds = array<i64: 16, 32>}, {pipeline_mode = #tpu.pipeline_mode<synchronous>, transform_indices = @transform_1, window_bounds = array<i64: 1, 32>}, {pipeline_mode = #tpu.pipeline_mode<synchronous>, transform_indices = @transform_2, window_bounds = array<i64: 1, 32>}, {transform_indices = @transform_3, window_bounds = array<i64: 32, 96>}, {transform_indices = @transform_4, window_bounds = array<i64: 1, 96>}, {transform_indices = @transform_5, window_bounds = array<i64: 16, 96>}]} {
    %c0 = arith.constant 0 : index
    %c0_0 = arith.constant 0 : index
    %0 = vector.load %arg2[%c0, %c0_0] : memref<16x32xbf16, #tpu.memory_space<vmem>>, vector<16x32xbf16>
    %1 = arith.extf %0 : vector<16x32xbf16> to vector<16x32xf32>
    %cst = arith.constant dense<0.000000e+00> : vector<16xf32>
    %2 = vector.multi_reduction <add>, %1, %cst [1] : vector<16x32xf32> to vector<16xf32>
    %3 = vector.shape_cast %2 : vector<16xf32> to vector<16x1xf32>
    %cst_1 = arith.constant 3.200000e+01 : f32
    %4 = vector.broadcast %cst_1 : f32 to vector<16x1xf32>
    %5 = arith.divf %3, %4 : vector<16x1xf32>
    %6 = vector.broadcast %5 : vector<16x1xf32> to vector<16x32xf32>
    %7 = arith.subf %1, %6 : vector<16x32xf32>
    %8 = arith.mulf %7, %7 : vector<16x32xf32>
    %cst_2 = arith.constant dense<0.000000e+00> : vector<16xf32>
    %9 = vector.multi_reduction <add>, %8, %cst_2 [1] : vector<16x32xf32> to vector<16xf32>
    %10 = vector.shape_cast %9 : vector<16xf32> to vector<16x1xf32>
    %cst_3 = arith.constant 3.200000e+01 : f32
    %11 = vector.broadcast %cst_3 : f32 to vector<16x1xf32>
    %12 = arith.divf %10, %11 : vector<16x1xf32>
    %cst_4 = arith.constant 9.99999974E-6 : f32
    %13 = vector.broadcast %cst_4 : f32 to vector<16x1xf32>
    %14 = arith.addf %12, %13 : vector<16x1xf32>
    %15 = math.rsqrt %14 : vector<16x1xf32>
    %16 = vector.broadcast %15 : vector<16x1xf32> to vector<16x32xf32>
    %17 = arith.mulf %7, %16 : vector<16x32xf32>
    %c0_5 = arith.constant 0 : index
    %c0_6 = arith.constant 0 : index
    %18 = vector.load %arg3[%c0_5, %c0_6] : memref<1x32xf32, #tpu.memory_space<vmem>>, vector<1x32xf32>
    %19 = vector.broadcast %18 : vector<1x32xf32> to vector<16x32xf32>
    %20 = arith.mulf %17, %19 : vector<16x32xf32>
    %c0_7 = arith.constant 0 : index
    %c0_8 = arith.constant 0 : index
    %21 = vector.load %arg4[%c0_7, %c0_8] : memref<1x32xf32, #tpu.memory_space<vmem>>, vector<1x32xf32>
    %22 = vector.broadcast %21 : vector<1x32xf32> to vector<16x32xf32>
    %23 = arith.addf %20, %22 : vector<16x32xf32>
    %24 = arith.truncf %23 : vector<16x32xf32> to vector<16x32xbf16>
    %c0_9 = arith.constant 0 : index
    %c0_10 = arith.constant 0 : index
    %25 = vector.load %arg5[%c0_9, %c0_10] : memref<32x96xbf16, #tpu.memory_space<vmem>>, vector<32x96xbf16>
    %cst_11 = arith.constant dense<0.000000e+00> : vector<16x96xf32>
    %26 = tpu.matmul %24, %25, %cst_11 {dimension_numbers = #tpu.dot_dimension_numbers<[1], [0], [0], [1], [0, 0, 1, 1], [], []>} : vector<16x32xbf16>, vector<32x96xbf16>, vector<16x96xf32> -> vector<16x96xf32>
    %c0_12 = arith.constant 0 : index
    %c0_13 = arith.constant 0 : index
    %27 = vector.load %arg6[%c0_12, %c0_13] : memref<1x96xf32, #tpu.memory_space<vmem>>, vector<1x96xf32>
    %28 = vector.broadcast %27 : vector<1x96xf32> to vector<16x96xf32>
    %29 = arith.addf %26, %28 : vector<16x96xf32>
    %30 = arith.truncf %29 : vector<16x96xf32> to vector<16x96xbf16>
    %c0_14 = arith.constant 0 : index
    %c0_15 = arith.constant 0 : index
    %31 = vector.load %arg7[%c0_14, %c0_15] : memref<16x96xbf16, #tpu.memory_space<vmem>>, vector<16x96xbf16>
    tpu.vector_store %arg7[%c0_14, %c0_15], %30 {strides = array<i32>} : memref<16x96xbf16, #tpu.memory_space<vmem>>, vector<16x96xbf16>,
    return
  }
  func.func @transform_0(%arg0: i32, %arg1: i32) -> (i32, i32) {
    %c0_i32 = arith.constant 0 : i32
    %c0_i32_0 = arith.constant 0 : i32
    return %arg0, %c0_i32 : i32, i32
  }
  func.func @transform_1(%arg0: i32, %arg1: i32) -> (i32, i32) {
    %c0_i32 = arith.constant 0 : i32
    %c0_i32_0 = arith.constant 0 : i32
    %c0_i32_1 = arith.constant 0 : i32
    return %c0_i32, %c0_i32_0 : i32, i32
  }
  func.func @transform_2(%arg0: i32, %arg1: i32) -> (i32, i32) {
    %c0_i32 = arith.constant 0 : i32
    %c0_i32_0 = arith.constant 0 : i32
    %c0_i32_1 = arith.constant 0 : i32
    return %c0_i32, %c0_i32_0 : i32, i32
  }
  func.func @transform_3(%arg0: i32, %arg1: i32) -> (i32, i32) {
    %c0_i32 = arith.constant 0 : i32
    %c0_i32_0 = arith.constant 0 : i32
    return %c0_i32, %arg1 : i32, i32
  }
  func.func @transform_4(%arg0: i32, %arg1: i32) -> (i32, i32) {
    %c0_i32 = arith.constant 0 : i32
    %c0_i32_0 = arith.constant 0 : i32
    return %c0_i32, %arg1 : i32, i32
  }
  func.func @transform_5(%arg0: i32, %arg1: i32) -> (i32, i32) {
    %c0_i32 = arith.constant 0 : i32
    return %arg0, %arg1 : i32, i32
  }
}

</mosaic_0001>

<llo_original>
// kernel: tpu_custom_call.1
$region0: #{tpu_custom_call.1}
  #allocation0 [shape = 'u32[]', space=smem, size = 0x4, offset = 0x4, fixed_abs, tag = 'smem constant byte address 0x4 - core index']
  #allocation1 [shape = 'u32[144,128]{1,0:T(1,128)}', space=vmem, size = 0x12000, scoped, tag = 'internal scratch']
  %s0 = inlined_call_operand.hbm [shape: bf16[16,32], index: 0, kind: input, shape index: {}]
  %s1 = inlined_call_operand.vmem [shape: f32[1,32], index: 1, kind: input, shape index: {}]
  %s2 = inlined_call_operand.vmem [shape: f32[1,32], index: 2, kind: input, shape index: {}]
  %s3 = inlined_call_operand.hbm [shape: bf16[32,96], index: 3, kind: input, shape index: {}]
  %s4 = inlined_call_operand.vmem [shape: f32[1,96], index: 4, kind: input, shape index: {}]
  %s5 = inlined_call_operand.hbm [shape: bf16[16,96], index: 5, kind: output, shape index: {}]
  %s6 = sld [smem:[#allocation0]]
  $region38: #{tpu_custom_call.1} parent=0
    _
  %s8 = ssub.s32 1, %s6
  %s9 = scalar_select 0, %s8, %s6
  $region1: #{tpu_custom_call.1} parent=0
    #allocation2 [shape = 'u8[4096]{0}', space=vmem, size = 0x1000, scoped, tag = 'input window, operand 0, single buffered']
    #allocation3 [shape = 's32[1]{0}', space=sflag, size = 0x4, scoped, tag = 'scoped memory for tpu_custom_call.1']
    #allocation4 [shape = 's32[1]{0}', space=sflag, size = 0x4, scoped, tag = 'scoped memory for tpu_custom_call.1']
    #allocation5 [shape = 'u8[8192]{0}', space=vmem, size = 0x2000, scoped, tag = 'input window, operand 3, single buffered']
    #allocation6 [shape = 's32[1]{0}', space=sflag, size = 0x4, scoped, tag = 'scoped memory for tpu_custom_call.1']
    #allocation7 [shape = 'u8[4096]{0}', space=vmem, size = 0x1000, scoped, tag = 'output window, operand 0, single buffered']
    %10 = vsyncpa [#allocation3], 0
    %11 = vsyncpa [#allocation6], 0
    %12 = vsyncpa [#allocation4], 0
    // Predicated region
    $region2: #{tpu_custom_call.1} parent=1 // pred_check
      _
    $region3: #{tpu_custom_call.1} parent=1 // pred_check_branch
      %14 = sbr.rel (0) target = $region5
    $region4: #{tpu_custom_call.1} parent=1 // pred_region
      %s16 = ssub.s32 128, 128
      %17 = vsyncadd [#allocation3], %s16
      %s18 = sshll.u32 [#allocation2], 4
      %s19 = int_to_ptr.vmem [resolvable:$true] %s18
      %24 = dma.hbm_to_vmem [thread:$0]  %s0, 128, %s19, [#allocation3], 64, 64, 4
    $region5: #{tpu_custom_call.1} parent=1 // pred_fallthru
      _
    // Predicated region
    $region6: #{tpu_custom_call.1} parent=1 // pred_check
      _
    $region7: #{tpu_custom_call.1} parent=1 // pred_check_branch
      %26 = sbr.rel (0) target = $region9
    $region8: #{tpu_custom_call.1} parent=1 // pred_region
      _
    $region9: #{tpu_custom_call.1} parent=1 // pred_fallthru
      _
    // Predicated region
    $region10: #{tpu_custom_call.1} parent=1 // pred_check
      _
    $region11: #{tpu_custom_call.1} parent=1 // pred_check_branch
      %28 = sbr.rel (0) target = $region13
    $region12: #{tpu_custom_call.1} parent=1 // pred_region
      _
    $region13: #{tpu_custom_call.1} parent=1 // pred_fallthru
      _
    // Predicated region
    $region14: #{tpu_custom_call.1} parent=1 // pred_check
      _
    $region15: #{tpu_custom_call.1} parent=1 // pred_check_branch
      %30 = sbr.rel (0) target = $region17
    $region16: #{tpu_custom_call.1} parent=1 // pred_region
      %s32 = ssub.s32 256, 256
      %33 = vsyncadd [#allocation6], %s32
      %s34 = sshll.u32 [#allocation5], 4
      %s35 = int_to_ptr.vmem [resolvable:$true] %s34
      %40 = dma.hbm_to_vmem [thread:$0]  %s3, 256, %s35, [#allocation6], 64, 64, 4
    $region17: #{tpu_custom_call.1} parent=1 // pred_fallthru
      _
    // Predicated region
    $region18: #{tpu_custom_call.1} parent=1 // pred_check
      _
    $region19: #{tpu_custom_call.1} parent=1 // pred_check_branch
      %42 = sbr.rel (0) target = $region21
    $region20: #{tpu_custom_call.1} parent=1 // pred_region
      _
    $region21: #{tpu_custom_call.1} parent=1 // pred_fallthru
      _
    // Predicated region
    $region22: #{tpu_custom_call.1} parent=1 // pred_check
      _
    $region23: #{tpu_custom_call.1} parent=1 // pred_check_branch
      %44 = sbr.rel (0) target = $region25
    $region24: #{tpu_custom_call.1} parent=1 // pred_region
      %45 = dma.done [#allocation3], 128
    $region25: #{tpu_custom_call.1} parent=1 // pred_fallthru
      _
    // Predicated region
    $region26: #{tpu_custom_call.1} parent=1 // pred_check
      _
    $region27: #{tpu_custom_call.1} parent=1 // pred_check_branch
      %47 = sbr.rel (0) target = $region29
    $region28: #{tpu_custom_call.1} parent=1 // pred_region
      %48 = dma.done [#allocation6], 256
    $region29: #{tpu_custom_call.1} parent=1 // pred_fallthru
      _
    %v50 = vld [vmem:[#allocation2] sm:$0xf]
    %v51 = vld [vmem:[#allocation2 + $0x4] sm:$0xf]
    %v52 = vunpack.c.l.bf16 %v50
    %v53 = vunpack.c.l.bf16 %v51
    %vm54 = vcmask 261120
    %v55 = vsel %vm54, %v52, 0.0
    %56 = vadd.xlane.f32.xlu0 %v55
    %v57 = vpop.xlane.xlu0 %56
    %v58 = vsel %vm54, %v53, 0.0
    %59 = vadd.xlane.f32.xlu0 %v58
    %v60 = vpop.xlane.xlu0 %59
    %v61 = vrcp.pop 32.0
    %v62 = vmul.f32 %v57, %v61
    %v63 = vmul.f32 %v60, %v61
    %v64 = vsub.f32 %v52, %v62
    %v65 = vsub.f32 %v53, %v63
    %v66 = vmul.f32 %v64, %v64
    %v67 = vmul.f32 %v65, %v65
    %v68 = vsel %vm54, %v66, 0.0
    %69 = vadd.xlane.f32.xlu0 %v68
    %v70 = vpop.xlane.xlu0 %69
    %v71 = vsel %vm54, %v67, 0.0
    %72 = vadd.xlane.f32.xlu0 %v71
    %v73 = vpop.xlane.xlu0 %72
    %v74 = vmul.f32 %v70, %v61
    %v75 = vmul.f32 %v73, %v61
    %v76 = vadd.f32 %v74, 1e-05
    %v77 = vadd.f32 %v75, 1e-05
    %v78 = vrsqrt.pop %v76
    %v79 = vrsqrt.pop %v77
    %v80 = vmul.f32 %v64, %v78
    %v81 = vmul.f32 %v65, %v79
    %v82 = vld [vmem:[%s1] sm:$0x1]
    %v84 = vlaneseq
    %v85 = vshrl.u32 %v84, 7
    %v86 = vsub.s32 0, %v85
    %v87 = vrot.slane %v82, %v86
    %v89 = vmul.f32 %v80, %v87
    %v90 = vmul.f32 %v81, %v87
    %v91 = vld [vmem:[%s2] sm:$0x1]
    %v93 = vlaneseq
    %v94 = vshrl.u32 %v93, 7
    %v95 = vsub.s32 0, %v94
    %v96 = vrot.slane %v91, %v95
    %v98 = vadd.f32 %v89, %v96
    %v99 = vadd.f32 %v90, %v96
    %v100 = vpack.c.bf16 %v99, %v98
    %v101 = vld [vmem:[#allocation5] sm:$0xf]
    %v102 = vld [vmem:[#allocation5 + $0x4] sm:$0xf]
    %v103 = vld [vmem:[#allocation5 + $0x8] sm:$0xf]
    %v104 = vld [vmem:[#allocation5 + $0xc] sm:$0xf]
    %v105 = vld [vmem:[%s4] sm:$0x1]
    %v107 = vlaneseq
    %v108 = vshrl.u32 %v107, 7
    %v109 = vsub.s32 0, %v108
    %v110 = vrot.slane %v105, %v109
    %v116 = vunpack.c.l.b16 %v101
    %v117 = vunpack.c.l.b16 %v102
    %v118 = vunpack.c.l.b16 %v103
    %v119 = vunpack.c.l.b16 %v104
    %v120 = vpack.c.b16 %v117, %v116
    %v121 = vpack.c.b16 %v119, %v118
    %v125 = vsel %vm54, %v100, 0
    %127 = vmatprep.subr.bf16.mxu0 0
    %128 = vmatpush1.bf16.msra.mxu0 %v120
    %129 = vmatprep.subr.bf16.mxu0 0
    %130 = vmatpush1.bf16.msra.mxu0 %v121
    %131 = vmatprep.subr.bf16.mxu0 0
    %132 = vmatpush1.bf16.msra.mxu0 0
    %133 = vmatprep.subr.bf16.mxu0 0
    %134 = vmatpush1.bf16.msra.mxu0 0
    %135 = vmatprep.subr.bf16.mxu0 0
    %136 = vmatpush1.bf16.msra.mxu0 0
    %137 = vmatprep.subr.bf16.mxu0 0
    %138 = vmatpush1.bf16.msra.mxu0 0
    %139 = vmatprep.subr.bf16.mxu0 0
    %140 = vmatpush1.bf16.msra.mxu0 0
    %141 = vmatprep.subr.bf16.mxu0 0
    %142 = vmatpush1.bf16.msra.mxu0 0
    %143 = vmatprep.subr.bf16.mxu0 0
    %144 = vmatpush1.bf16.msra.mxu0 0
    %145 = vmatprep.subr.bf16.mxu0 0
    %146 = vmatpush1.bf16.msra.mxu0 0
    %147 = vmatprep.subr.bf16.mxu0 0
    %148 = vmatpush1.bf16.msra.mxu0 0
    %149 = vmatprep.subr.bf16.mxu0 0
    %150 = vmatpush1.bf16.msra.mxu0 0
    %151 = vmatprep.subr.bf16.mxu0 0
    %152 = vmatpush1.bf16.msra.mxu0 0
    %153 = vmatprep.subr.bf16.mxu0 0
    %154 = vmatpush1.bf16.msra.mxu0 0
    %155 = vmatprep.subr.bf16.mxu0 0
    %156 = vmatpush1.bf16.msra.mxu0 0
    %157 = vmatprep.subr.bf16.mxu0 0
    %158 = vmatpush1.bf16.msra.mxu0 0
    %159 = vmatprep.mubr.bf16.mxu0 0
    %160 = vmatmul.mubr.bf16.gmra.mrb[0].mxu0 %v125
    %v161 = vpop.f32.mrb[0].mxu0
    %v162 = vadd.f32 %v110, %v161
    %v163 = vpop.f32.mrb[0].mxu0
    %v164 = vpop.f32.mrb[0].mxu0
    %v165 = vadd.f32 %v110, %v164
    %v166 = vpop.f32.mrb[0].mxu0
    %167 = vdwg.mxu0
    %v168 = vpack.c.bf16 %v165, %v162
    %v170 = vunpack.c.l.b16 %v168
    %v171 = vunpack.c.h.b16 %v168
    %v172 = vpack.c.b16 %v170, %v170
    %v173 = vpack.c.b16 %v171, %v171
    %vm176 = vcmask 781312
    %177 = vst.msk [vmem:[#allocation7] sm:$0xf] %vm176, %v172
    %178 = vst.msk [vmem:[#allocation7 + $0x4] sm:$0xf] %vm176, %v173
    // Predicated region
    $region30: #{tpu_custom_call.1} parent=1 // pred_check
      _
    $region31: #{tpu_custom_call.1} parent=1 // pred_check_branch
      %180 = sbr.rel (0) target = $region33
    $region32: #{tpu_custom_call.1} parent=1 // pred_region
      %s182 = ssub.s32 128, 128
      %183 = vsyncadd [#allocation4], %s182
      %s184 = sshll.u32 [#allocation7], 4
      %s185 = int_to_ptr.vmem [resolvable:$true] %s184
      %190 = dma.vmem_to_hbm [thread:$0]  %s185, 128, %s5, [#allocation4], 64, 64, 4
    $region33: #{tpu_custom_call.1} parent=1 // pred_fallthru
      _
    // Predicated region
    $region34: #{tpu_custom_call.1} parent=1 // pred_check
      _
    $region35: #{tpu_custom_call.1} parent=1 // pred_check_branch
      %192 = sbr.rel (0) target = $region37
    $region36: #{tpu_custom_call.1} parent=1 // pred_region
      %193 = dma.done [#allocation4], 128
    $region37: #{tpu_custom_call.1} parent=1 // pred_fallthru
      _
    %194 = vsyncpa [#allocation3], 1
    %195 = vsyncpa [#allocation6], 1
    %196 = vsyncpa [#allocation4], 1

</llo_original>
